<compile_context>
chip_gen: v5e
topology: v5e:2x2
jax: 0.10.0
libtpu: 0.0.40
codegen_flags: <defaults>
</compile_context>

<pallas_src>
import jax
import jax.numpy as jnp
from jax.experimental import pallas as pl
from jax.experimental.pallas import tpu as pltpu


def classifier_logsoftmax_kernel(x_ref, w_ref, b_ref, o_ref):
    # x_ref: (C_in, TN)  channel-major per-point feature tile (bf16 or f32)
    # w_ref: (NC, C_in)  classifier weight (Conv1d k=1), same dtype as x
    # b_ref: (NC, 1)     classifier bias (f32)
    # o_ref: (NC, TN)    log-probabilities, classes on sublanes, points on lanes
    logits = jnp.dot(w_ref[...], x_ref[...],
                     preferred_element_type=jnp.float32) + b_ref[...]
    m = jnp.max(logits, axis=0, keepdims=True)
    z = logits - m
    lse = jnp.log(jnp.sum(jnp.exp(z), axis=0, keepdims=True))
    o_ref[...] = (z - lse).astype(o_ref.dtype)


def net_head_forward(feat_cm, w, b, *, tile_n=1024):
    """Fused Conv1d(k=1) classifier + log_softmax head.

    feat_cm: (C_in, N) channel-major per-point features (bf16 or f32)
             -- this is exactly the (1, C, N) tensor PyTorch feeds the classifier.
    w:       (NC, C_in) classifier weight
    b:       (NC,)      classifier bias
    returns  (1, N, NC) f32 log-probabilities (matches PyTorch output layout).
    """
    C_in, N = feat_cm.shape
    NC = w.shape[0]

    w_c = w.astype(feat_cm.dtype)                       # bf16 x bf16 -> f32 acc on MXU
    b2 = b.reshape(NC, 1).astype(jnp.float32)

    itemsize = jnp.dtype(feat_cm.dtype).itemsize
    cost = pl.CostEstimate(
        flops=2 * N * C_in * NC,
        transcendentals=N * NC,
        bytes_accessed=N * C_in * itemsize + NC * C_in * itemsize
        + NC * 4 + N * NC * 4,
    )

    out_cn = pl.pallas_call(
        classifier_logsoftmax_kernel,
        out_shape=jax.ShapeDtypeStruct((NC, N), jnp.float32),
        grid_spec=pltpu.PrefetchScalarGridSpec(
            num_scalar_prefetch=0,
            grid=(pl.cdiv(N, tile_n),),                 # ragged N: last tile masked
            in_specs=[
                pl.BlockSpec((C_in, tile_n), lambda i: (0, i)),
                pl.BlockSpec((NC, C_in), lambda i: (0, 0)),   # resident in VMEM
                pl.BlockSpec((NC, 1), lambda i: (0, 0)),      # resident in VMEM
            ],
            out_specs=pl.BlockSpec((NC, tile_n), lambda i: (0, i)),
        ),
        compiler_params=pltpu.CompilerParams(
            dimension_semantics=("parallel",),
        ),
        cost_estimate=cost,
    )(feat_cm, w_c, b2)

    # Matches PyTorch: (1, num_classes, N) -> permute(0,2,1) -> (1, N, num_classes)
    return jnp.transpose(out_cn, (1, 0))[None, :, :]


if __name__ == "__main__":
    # Small shapes consistent with the module's forward:
    #   N points (ragged, not a tile multiple), backbone output_nc features,
    #   num_classes classes.
    N = 2000          # number of points (exercises the masked partial last tile)
    OUTPUT_NC = 32    # backbone output_nc
    NUM_CLASSES = 8   # num_classes

    key = jax.random.PRNGKey(0)
    k_feat, k_w, k_b = jax.random.split(key, 3)

    # Stand-in for the backbone's per-point features, handed over channel-major
    # (C_in, N) in bf16 (this is the layout the PyTorch module permutes into
    # before the Conv1d classifier anyway).
    feat_cm = jax.random.normal(
        k_feat, (OUTPUT_NC, N), dtype=jnp.float32).astype(jnp.bfloat16)

    # Classifier params: Conv1d(output_nc, num_classes, k=1, bias=True),
    # weight stored (NC, C_in) == torch weight (NC, C_in, 1) squeezed.
    w = jax.random.normal(k_w, (NUM_CLASSES, OUTPUT_NC), dtype=jnp.float32) * 0.1
    b = jax.random.normal(k_b, (NUM_CLASSES,), dtype=jnp.float32) * 0.01

    out = net_head_forward(feat_cm, w, b, tile_n=1024)
    out = jax.block_until_ready(out)

    assert out.shape == (1, N, NUM_CLASSES)

    # Reference (same bf16-quantized operands, f32 math).
    feat_f32 = feat_cm.astype(jnp.float32)
    w_f32 = w.astype(jnp.bfloat16).astype(jnp.float32)
    ref_logits = jnp.dot(w_f32, feat_f32) + b[:, None]
    ref = jax.nn.log_softmax(ref_logits, axis=0).T[None, :, :]
    max_err = float(jnp.max(jnp.abs(out - ref)))
    assert max_err < 1e-2, f"max abs err {max_err}"

    # Sanity: log_softmax rows must sum to ~1 in prob space.
    probs_sum = jnp.sum(jnp.exp(out), axis=-1)
    assert bool(jnp.all(jnp.abs(probs_sum - 1.0) < 1e-3))

    print("KERNEL_OK")
</pallas_src>

<mosaic_0001>
module attributes {stable_mosaic.version = 11 : i64} {
  func.func @classifier_logsoftmax_kernel(%arg0: i32, %arg1: memref<32x1024xbf16, #tpu.memory_space<vmem>>, %arg2: memref<8x32xbf16, #tpu.memory_space<vmem>>, %arg3: memref<8x1xf32, #tpu.memory_space<vmem>>, %arg4: memref<8x1024xf32, #tpu.memory_space<vmem>>) attributes {dimension_semantics = [#tpu.dimension_semantics<parallel>], iteration_bounds = array<i64: 2>, scalar_prefetch = 0 : i64, scratch_operands = 0 : i64, tpu.core_type = #tpu.core_type<tc>, window_params = [{transform_indices = @transform_0, window_bounds = array<i64: 32, 1024>}, {pipeline_mode = #tpu.pipeline_mode<synchronous>, transform_indices = @transform_1, window_bounds = array<i64: 8, 32>}, {pipeline_mode = #tpu.pipeline_mode<synchronous>, transform_indices = @transform_2, window_bounds = array<i64: 8, 1>}, {transform_indices = @transform_3, window_bounds = array<i64: 8, 1024>}]} {
    %c0 = arith.constant 0 : index
    %c0_0 = arith.constant 0 : index
    %0 = vector.load %arg2[%c0, %c0_0] : memref<8x32xbf16, #tpu.memory_space<vmem>>, vector<8x32xbf16>
    %c0_1 = arith.constant 0 : index
    %c0_2 = arith.constant 0 : index
    %1 = vector.load %arg1[%c0_1, %c0_2] : memref<32x1024xbf16, #tpu.memory_space<vmem>>, vector<32x1024xbf16>
    %cst = arith.constant dense<0.000000e+00> : vector<8x1024xf32>
    %2 = tpu.matmul %0, %1, %cst {dimension_numbers = #tpu.dot_dimension_numbers<[1], [0], [0], [1], [0, 0, 1, 1], [], []>} : vector<8x32xbf16>, vector<32x1024xbf16>, vector<8x1024xf32> -> vector<8x1024xf32>
    %c0_3 = arith.constant 0 : index
    %c0_4 = arith.constant 0 : index
    %3 = vector.load %arg3[%c0_3, %c0_4] : memref<8x1xf32, #tpu.memory_space<vmem>>, vector<8x1xf32>
    %4 = vector.broadcast %3 : vector<8x1xf32> to vector<8x1024xf32>
    %5 = arith.addf %2, %4 : vector<8x1024xf32>
    %cst_5 = arith.constant dense<0xFF800000> : vector<1024xf32>
    %6 = vector.multi_reduction <maximumf>, %5, %cst_5 [0] : vector<8x1024xf32> to vector<1024xf32>
    %7 = vector.shape_cast %6 : vector<1024xf32> to vector<1x1024xf32>
    %8 = vector.broadcast %7 : vector<1x1024xf32> to vector<8x1024xf32>
    %9 = arith.subf %5, %8 : vector<8x1024xf32>
    %10 = math.exp %9 : vector<8x1024xf32>
    %cst_6 = arith.constant dense<0.000000e+00> : vector<1024xf32>
    %11 = vector.multi_reduction <add>, %10, %cst_6 [0] : vector<8x1024xf32> to vector<1024xf32>
    %12 = vector.shape_cast %11 : vector<1024xf32> to vector<1x1024xf32>
    %13 = math.log %12 : vector<1x1024xf32>
    %14 = vector.broadcast %13 : vector<1x1024xf32> to vector<8x1024xf32>
    %15 = arith.subf %9, %14 : vector<8x1024xf32>
    %c0_7 = arith.constant 0 : index
    %c0_8 = arith.constant 0 : index
    %16 = vector.load %arg4[%c0_7, %c0_8] : memref<8x1024xf32, #tpu.memory_space<vmem>>, vector<8x1024xf32>
    tpu.vector_store %arg4[%c0_7, %c0_8], %15 {strides = array<i32>} : memref<8x1024xf32, #tpu.memory_space<vmem>>, vector<8x1024xf32>,
    return
  }
  func.func @transform_0(%arg0: i32) -> (i32, i32) {
    %c0_i32 = arith.constant 0 : i32
    %c0_i32_0 = arith.constant 0 : i32
    return %c0_i32, %arg0 : i32, i32
  }
  func.func @transform_1(%arg0: i32) -> (i32, i32) {
    %c0_i32 = arith.constant 0 : i32
    %c0_i32_0 = arith.constant 0 : i32
    %c0_i32_1 = arith.constant 0 : i32
    return %c0_i32, %c0_i32_0 : i32, i32
  }
  func.func @transform_2(%arg0: i32) -> (i32, i32) {
    %c0_i32 = arith.constant 0 : i32
    %c0_i32_0 = arith.constant 0 : i32
    %c0_i32_1 = arith.constant 0 : i32
    return %c0_i32, %c0_i32_0 : i32, i32
  }
  func.func @transform_3(%arg0: i32) -> (i32, i32) {
    %c0_i32 = arith.constant 0 : i32
    %c0_i32_0 = arith.constant 0 : i32
    return %c0_i32, %arg0 : i32, i32
  }
}

</mosaic_0001>

<llo_original>
// kernel: tpu_custom_call.1
$region0: #{tpu_custom_call.1}
  #allocation0 [shape = 'u32[]', space=smem, size = 0x4, offset = 0x4, fixed_abs, tag = 'smem constant byte address 0x4 - core index']
  #allocation1 [shape = 'u32[72,128]{1,0:T(1,128)}', space=vmem, size = 0x9000, scoped, tag = 'internal scratch']
  %s0 = inlined_call_operand.hbm [shape: bf16[32,2000], index: 0, kind: input, shape index: {}]
  %s1 = inlined_call_operand.vmem [shape: bf16[8,32], index: 1, kind: input, shape index: {}]
  %s2 = inlined_call_operand.vmem [shape: f32[8,1], index: 2, kind: input, shape index: {}]
  %s3 = inlined_call_operand.hbm [shape: f32[8,2000], index: 3, kind: output, shape index: {}]
  %s4 = sld [smem:[#allocation0]]
  $region49: #{tpu_custom_call.1} parent=0
    _
  %s6 = ssub.s32 1, %s4
  %s7 = scalar_select 0, %s6, %s4
  $region1: #{tpu_custom_call.1} parent=0
    #allocation2 [shape = 'u8[131072]{0}', space=vmem, size = 0x20000, scoped, tag = 'input window, operand 0']
    #allocation3 [shape = 's32[2]{0}', space=sflag, size = 0x8, scoped, tag = 'scoped memory for tpu_custom_call.1']
    #allocation4 [shape = 's32[2]{0}', space=sflag, size = 0x8, scoped, tag = 'scoped memory for tpu_custom_call.1']
    #allocation5 [shape = 'u8[65536]{0}', space=vmem, size = 0x10000, scoped, tag = 'output window, operand 0']
    %8 = vsyncpa [#allocation3], 0
    %s9 = scalar_lea.sflag [#allocation3], 1
    %10 = vsyncpa %s9, 0
    %11 = vsyncpa [#allocation4], 0
    %s12 = scalar_lea.sflag [#allocation4], 1
    %13 = vsyncpa %s12, 0
    loop: start=0, step=1, limit=4
    $region2: #{tpu_custom_call.1} parent=1 // loop_pre_header
      _
    $region3: #{tpu_custom_call.1} parent=1 // loop_header
      %s15 = sphi 0, %s19
      %p16 = scmp.ge.s32.totalorder %s15, 4
      %s25 = sphi 0, %s27
      %s28 = sphi 0, %s25
      %s29 = sphi 0, %s28
      %s45 = sphi 0, %s29
      %s49 = sphi 0, %s49
      %s51 = sphi 0, %s49
      %s52 = sphi 0, %s51
      %s66 = sphi 0, %s52
      %s70 = sphi 0, %s70
      %s72 = sphi 0, %s70
      %s73 = sphi 0, %s72
      %s87 = sphi 0, %s73
      %s93 = sphi 0, %s95
      %s96 = sphi 0, %s93
      %s97 = sphi 0, %s96
      %s113 = sphi 0, %s97
    $region4: #{tpu_custom_call.1} parent=1 // loop_header_branch
      %18 = sbr.rel (%p16) target = $region8
    $region5: #{tpu_custom_call.1} parent=1 // loop_body
      %s20 = ssub.s32 %s15, 1
      %s21 = ssub.s32 %s15, 2
      %s22 = sadd.s32 %s15, 1
      %s23 = ssub.s32 %s15, %s22
      %p24 = scmp.eq.s32.totalorder %s23, 0
      %s26 = sadd.s32 %s25, 1
      %s27 = scalar_select %p24, %s25, %s26
      %p30 = pneg %p24
      %p31 = scmp.eq.s32.totalorder %s15, 1
      %p32 = por %p30, %p31
      %p33 = scmp.ne.s32.totalorder %s25, %s28
      %p34 = scmp.eq.s32.totalorder %s15, 0
      %p35 = por %p33, %p34
      %p36 = scmp.ne.s32.totalorder %s25, %s28
      %p37 = scmp.eq.s32.totalorder %s20, 1
      %p38 = por %p36, %p37
      %p39 = scmp.ne.s32.totalorder %s28, %s29
      %p40 = scmp.eq.s32.totalorder %s20, 0
      %p41 = por %p39, %p40
      %p42 = scmp.ne.s32.totalorder %s28, %s29
      %p43 = scmp.eq.s32.totalorder %s21, 1
      %p44 = por %p42, %p43
      %p46 = scmp.ne.s32.totalorder %s29, %s45
      %p47 = scmp.eq.s32.totalorder %s21, 0
      %p48 = por %p46, %p47
      %s50 = sadd.s32 %s49, 1
      %p53 = scmp.eq.s32.totalorder %s15, 1
      %p54 = scmp.ne.s32.totalorder %s49, %s51
      %p55 = scmp.eq.s32.totalorder %s15, 0
      %p56 = por %p54, %p55
      %p57 = scmp.ne.s32.totalorder %s49, %s51
      %p58 = scmp.eq.s32.totalorder %s20, 1
      %p59 = por %p57, %p58
      %p60 = scmp.ne.s32.totalorder %s51, %s52
      %p61 = scmp.eq.s32.totalorder %s20, 0
      %p62 = por %p60, %p61
      %p63 = scmp.ne.s32.totalorder %s51, %s52
      %p64 = scmp.eq.s32.totalorder %s21, 1
      %p65 = por %p63, %p64
      %p67 = scmp.ne.s32.totalorder %s52, %s66
      %p68 = scmp.eq.s32.totalorder %s21, 0
      %p69 = por %p67, %p68
      %s71 = sadd.s32 %s70, 1
      %p74 = scmp.eq.s32.totalorder %s15, 1
      %p75 = scmp.ne.s32.totalorder %s70, %s72
      %p76 = scmp.eq.s32.totalorder %s15, 0
      %p77 = por %p75, %p76
      %p78 = scmp.ne.s32.totalorder %s70, %s72
      %p79 = scmp.eq.s32.totalorder %s20, 1
      %p80 = por %p78, %p79
      %p81 = scmp.ne.s32.totalorder %s72, %s73
      %p82 = scmp.eq.s32.totalorder %s20, 0
      %p83 = por %p81, %p82
      %p84 = scmp.ne.s32.totalorder %s72, %s73
      %p85 = scmp.eq.s32.totalorder %s21, 1
      %p86 = por %p84, %p85
      %p88 = scmp.ne.s32.totalorder %s73, %s87
      %p89 = scmp.eq.s32.totalorder %s21, 0
      %p90 = por %p88, %p89
      %s91 = ssub.s32 %s15, %s22
      %p92 = scmp.eq.s32.totalorder %s91, 0
      %s94 = sadd.s32 %s93, 1
      %s95 = scalar_select %p92, %s93, %s94
      %p98 = pneg %p92
      %p99 = scmp.eq.s32.totalorder %s15, 1
      %p100 = por %p98, %p99
      %p101 = scmp.ne.s32.totalorder %s93, %s96
      %p102 = scmp.eq.s32.totalorder %s15, 0
      %p103 = por %p101, %p102
      %p104 = scmp.ne.s32.totalorder %s93, %s96
      %p105 = scmp.eq.s32.totalorder %s20, 1
      %p106 = por %p104, %p105
      %p107 = scmp.ne.s32.totalorder %s96, %s97
      %p108 = scmp.eq.s32.totalorder %s20, 0
      %p109 = por %p107, %p108
      %p110 = scmp.ne.s32.totalorder %s96, %s97
      %p111 = scmp.eq.s32.totalorder %s21, 1
      %p112 = por %p110, %p111
      %p114 = scmp.ne.s32.totalorder %s97, %s113
      %p115 = scmp.eq.s32.totalorder %s21, 0
      %p116 = por %p114, %p115
      %p117 = scmp.le.s32.totalorder 1, %s15
      %p118 = scmp.lt.s32.totalorder %s15, 3
      %p119 = pnand %p117, %p118
      %p120 = pneg %p119
      // Predicated region
      $region9: #{tpu_custom_call.1} parent=5 // pred_check
        _
      $region10: #{tpu_custom_call.1} parent=5 // pred_check_branch
        %122 = sbr.rel (%p119) target = $region12
      $region11: #{tpu_custom_call.1} parent=5 // pred_region
        %s123 = ssub.s32 %s15, 1
        // Predicated region
        $region13: #{tpu_custom_call.1} parent=11 // pred_check
          %p124 = pneg %p62
        $region14: #{tpu_custom_call.1} parent=11 // pred_check_branch
          %126 = sbr.rel (%p124) target = $region16
        $region15: #{tpu_custom_call.1} parent=11 // pred_region
          _
        $region16: #{tpu_custom_call.1} parent=11 // pred_fallthru
          _
        // Predicated region
        $region17: #{tpu_custom_call.1} parent=11 // pred_check
          %p127 = pneg %p83
        $region18: #{tpu_custom_call.1} parent=11 // pred_check_branch
          %129 = sbr.rel (%p127) target = $region20
        $region19: #{tpu_custom_call.1} parent=11 // pred_region
          _
        $region20: #{tpu_custom_call.1} parent=11 // pred_fallthru
          _
      $region12: #{tpu_custom_call.1} parent=5 // pred_fallthru
        _
      %p130 = scmp.lt.s32.totalorder %s15, 2
      // Predicated region
      $region21: #{tpu_custom_call.1} parent=5 // pred_check
        %p131 = pneg %p130
      $region22: #{tpu_custom_call.1} parent=5 // pred_check_branch
        %133 = sbr.rel (%p131) target = $region24
      $region23: #{tpu_custom_call.1} parent=5 // pred_region
        // Predicated region
        $region25: #{tpu_custom_call.1} parent=23 // pred_check
          %p134 = pneg %p35
        $region26: #{tpu_custom_call.1} parent=23 // pred_check_branch
          %136 = sbr.rel (%p134) target = $region28
        $region27: #{tpu_custom_call.1} parent=23 // pred_region
          %s137 = sand.u32 %s25, 1
          %s138 = scalar_lea.sflag [#allocation3], %s137
          %s139 = sand.u32 %s25, 1
          %s140 = smul.addr %s139, 128
          %s141 = scalar_lea.vmem [#allocation2], %s140
          %s142 = smul.u32 8, %s15
          %144 = vsyncadd %s138, 0
          %s145 = smul.addr %s142, 4
          %s146 = scalar_lea.hbm %s0, %s145
          %s147 = sshll.u32 %s146, 4
          %s148 = int_to_ptr.hbm [resolvable:$true] %s147
          %s149 = sshll.u32 %s141, 4
          %s150 = int_to_ptr.vmem [resolvable:$true] %s149
          %155 = dma.hbm_to_vmem [thread:$0]  %s148, 2048, %s150, %s138, 1024, 512, 32
        $region28: #{tpu_custom_call.1} parent=23 // pred_fallthru
          _
      $region24: #{tpu_custom_call.1} parent=5 // pred_fallthru
        _
      %p156 = scmp.le.s32.totalorder 1, %s15
      %p157 = scmp.lt.s32.totalorder %s15, 3
      %p158 = pnand %p156, %p157
      %p159 = pneg %p158
      // Predicated region
      $region29: #{tpu_custom_call.1} parent=5 // pred_check
        _
      $region30: #{tpu_custom_call.1} parent=5 // pred_check_branch
        %161 = sbr.rel (%p158) target = $region32
      $region31: #{tpu_custom_call.1} parent=5 // pred_region
        %s162 = ssub.s32 %s15, 1
        %s163 = sand.u32 %s28, 1
        %s164 = scalar_lea.sflag [#allocation3], %s163
        %s165 = sand.u32 %s28, 1
        %s166 = smul.addr %s165, 128
        %s167 = scalar_lea.vmem [#allocation2], %s166
        // Predicated region
        $region33: #{tpu_custom_call.1} parent=31 // pred_check
          %p168 = pneg %p41
        $region34: #{tpu_custom_call.1} parent=31 // pred_check_branch
          %170 = sbr.rel (%p168) target = $region36
        $region35: #{tpu_custom_call.1} parent=31 // pred_region
          %172 = dma.done %s164, 2048
        $region36: #{tpu_custom_call.1} parent=31 // pred_fallthru
          _
        %s173 = sand.u32 %s28, 1
        %s174 = scalar_lea.sflag [#allocation3], %s173
        %s175 = sand.u32 %s28, 1
        %s176 = smul.addr %s175, 128
        %s177 = scalar_lea.vmem [#allocation2], %s176
        %p178 = pneg %p41
        %p179 = pneg %p38
        %p180 = pneg %p62
        %p181 = pneg %p59
        %p182 = pneg %p83
        %p183 = pneg %p80
        %p184 = pneg %p109
        %p185 = pneg %p106
        %s186 = sand.u32 %s96, 1
        %s187 = scalar_lea.sflag [#allocation4], %s186
        %s188 = sand.u32 %s96, 1
        %s189 = smul.addr %s188, 64
        %s190 = scalar_lea.vmem [#allocation5], %s189
        %s191 = smul.u32 8, %s20
        %s192 = smul.u32 8, %s20
        %v194 = vld [vmem:[%s1] sm:$0xf]
        %v195 = vld [vmem:[%s167] sm:$0xff]
        %v196 = vld [vmem:[%s167 + $0x8] sm:$0xff]
        %v197 = vld [vmem:[%s167 + $0x10] sm:$0xff]
        %v198 = vld [vmem:[%s167 + $0x18] sm:$0xff]
        %v199 = vld [vmem:[%s167 + $0x20] sm:$0xff]
        %v200 = vld [vmem:[%s167 + $0x28] sm:$0xff]
        %v201 = vld [vmem:[%s167 + $0x30] sm:$0xff]
        %v202 = vld [vmem:[%s167 + $0x38] sm:$0xff]
        %v203 = vld [vmem:[%s167 + $0x40] sm:$0xff]
        %v204 = vld [vmem:[%s167 + $0x48] sm:$0xff]
        %v205 = vld [vmem:[%s167 + $0x50] sm:$0xff]
        %v206 = vld [vmem:[%s167 + $0x58] sm:$0xff]
        %v207 = vld [vmem:[%s167 + $0x60] sm:$0xff]
        %v208 = vld [vmem:[%s167 + $0x68] sm:$0xff]
        %v209 = vld [vmem:[%s167 + $0x70] sm:$0xff]
        %v210 = vld [vmem:[%s167 + $0x78] sm:$0xff]
        %v211 = vld [vmem:[%s2] sm:$0xff]
        %213 = vset.pattern.permute.xlu0 0
        %214 = vperm.xlu0 %213, %v211
        %v215 = vpop.permute.xlu0 %214
        %v233 = vunpack.c.l.b16 %v195
        %v234 = vunpack.c.h.b16 %v195
        %v235 = vunpack.c.l.b16 %v196
        %v236 = vunpack.c.h.b16 %v196
        %v237 = vunpack.c.l.b16 %v197
        %v238 = vunpack.c.h.b16 %v197
        %v239 = vunpack.c.l.b16 %v198
        %v240 = vunpack.c.h.b16 %v198
        %v241 = vunpack.c.l.b16 %v199
        %v242 = vunpack.c.h.b16 %v199
        %v243 = vunpack.c.l.b16 %v200
        %v244 = vunpack.c.h.b16 %v200
        %v245 = vunpack.c.l.b16 %v201
        %v246 = vunpack.c.h.b16 %v201
        %v247 = vunpack.c.l.b16 %v202
        %v248 = vunpack.c.h.b16 %v202
        %v249 = vunpack.c.l.b16 %v203
        %v250 = vunpack.c.h.b16 %v203
        %v251 = vunpack.c.l.b16 %v204
        %v252 = vunpack.c.h.b16 %v204
        %v253 = vunpack.c.l.b16 %v205
        %v254 = vunpack.c.h.b16 %v205
        %v255 = vunpack.c.l.b16 %v206
        %v256 = vunpack.c.h.b16 %v206
        %v257 = vunpack.c.l.b16 %v207
        %v258 = vunpack.c.h.b16 %v207
        %v259 = vunpack.c.l.b16 %v208
        %v260 = vunpack.c.h.b16 %v208
        %v261 = vunpack.c.l.b16 %v209
        %v262 = vunpack.c.h.b16 %v209
        %v263 = vunpack.c.l.b16 %v210
        %v264 = vunpack.c.h.b16 %v210
        %v265 = vpack.c.b16 %v241, %v233
        %v266 = vpack.c.b16 %v242, %v234
        %v267 = vpack.c.b16 %v243, %v235
        %v268 = vpack.c.b16 %v244, %v236
        %v269 = vpack.c.b16 %v245, %v237
        %v270 = vpack.c.b16 %v246, %v238
        %v271 = vpack.c.b16 %v247, %v239
        %v272 = vpack.c.b16 %v248, %v240
        %v273 = vpack.c.b16 %v257, %v249
        %v274 = vpack.c.b16 %v258, %v250
        %v275 = vpack.c.b16 %v259, %v251
        %v276 = vpack.c.b16 %v260, %v252
        %v277 = vpack.c.b16 %v261, %v253
        %v278 = vpack.c.b16 %v262, %v254
        %v279 = vpack.c.b16 %v263, %v255
        %v280 = vpack.c.b16 %v264, %v256
        %vm297 = vcmask 261120
        %v299 = vsel %vm297, %v194, 0
        %301 = vmatpush.bf16.msra.mxu0 0
        %302 = vmatpush.bf16.msra.mxu0 0
        %303 = vmatpush.bf16.msra.mxu0 0
        %304 = vmatpush.bf16.msra.mxu0 0
        %305 = vmatpush.bf16.msra.mxu0 0
        %306 = vmatpush.bf16.msra.mxu0 0
        %307 = vmatpush.bf16.msra.mxu0 %v273
        %308 = vmatpush.bf16.msra.mxu0 %v265
        %309 = vmatmul.bf16.gmra.mxu0 %v299
        %v310 = vpop.f32.mrf.mxu0
        %v311 = vadd.f32 %v215, %v310
        %v312 = vpop.f32.mrf.mxu0
        %313 = vdwg.mxu0
        %314 = vmatpush.bf16.msra.mxu0 0
        %315 = vmatpush.bf16.msra.mxu0 0
        %316 = vmatpush.bf16.msra.mxu0 0
        %317 = vmatpush.bf16.msra.mxu0 0
        %318 = vmatpush.bf16.msra.mxu0 0
        %319 = vmatpush.bf16.msra.mxu0 0
        %320 = vmatpush.bf16.msra.mxu0 %v274
        %321 = vmatpush.bf16.msra.mxu0 %v266
        %322 = vmatmul.bf16.gmra.mxu0 %v299
        %v323 = vpop.f32.mrf.mxu0
        %v324 = vadd.f32 %v215, %v323
        %v325 = vpop.f32.mrf.mxu0
        %326 = vdwg.mxu0
        %327 = vmatpush.bf16.msra.mxu0 0
        %328 = vmatpush.bf16.msra.mxu0 0
        %329 = vmatpush.bf16.msra.mxu0 0
        %330 = vmatpush.bf16.msra.mxu0 0
        %331 = vmatpush.bf16.msra.mxu0 0
        %332 = vmatpush.bf16.msra.mxu0 0
        %333 = vmatpush.bf16.msra.mxu0 %v275
        %334 = vmatpush.bf16.msra.mxu0 %v267
        %335 = vmatmul.bf16.gmra.mxu0 %v299
        %v336 = vpop.f32.mrf.mxu0
        %v337 = vadd.f32 %v215, %v336
        %v338 = vpop.f32.mrf.mxu0
        %339 = vdwg.mxu0
        %340 = vmatpush.bf16.msra.mxu0 0
        %341 = vmatpush.bf16.msra.mxu0 0
        %342 = vmatpush.bf16.msra.mxu0 0
        %343 = vmatpush.bf16.msra.mxu0 0
        %344 = vmatpush.bf16.msra.mxu0 0
        %345 = vmatpush.bf16.msra.mxu0 0
        %346 = vmatpush.bf16.msra.mxu0 %v276
        %347 = vmatpush.bf16.msra.mxu0 %v268
        %348 = vmatmul.bf16.gmra.mxu0 %v299
        %v349 = vpop.f32.mrf.mxu0
        %v350 = vadd.f32 %v215, %v349
        %v351 = vpop.f32.mrf.mxu0
        %352 = vdwg.mxu0
        %353 = vmatpush.bf16.msra.mxu0 0
        %354 = vmatpush.bf16.msra.mxu0 0
        %355 = vmatpush.bf16.msra.mxu0 0
        %356 = vmatpush.bf16.msra.mxu0 0
        %357 = vmatpush.bf16.msra.mxu0 0
        %358 = vmatpush.bf16.msra.mxu0 0
        %359 = vmatpush.bf16.msra.mxu0 %v277
        %360 = vmatpush.bf16.msra.mxu0 %v269
        %361 = vmatmul.bf16.gmra.mxu0 %v299
        %v362 = vpop.f32.mrf.mxu0
        %v363 = vadd.f32 %v215, %v362
        %v364 = vpop.f32.mrf.mxu0
        %365 = vdwg.mxu0
        %366 = vmatpush.bf16.msra.mxu0 0
        %367 = vmatpush.bf16.msra.mxu0 0
        %368 = vmatpush.bf16.msra.mxu0 0
        %369 = vmatpush.bf16.msra.mxu0 0
        %370 = vmatpush.bf16.msra.mxu0 0
        %371 = vmatpush.bf16.msra.mxu0 0
        %372 = vmatpush.bf16.msra.mxu0 %v278
        %373 = vmatpush.bf16.msra.mxu0 %v270
        %374 = vmatmul.bf16.gmra.mxu0 %v299
        %v375 = vpop.f32.mrf.mxu0
        %v376 = vadd.f32 %v215, %v375
        %v377 = vpop.f32.mrf.mxu0
        %378 = vdwg.mxu0
        %379 = vmatpush.bf16.msra.mxu0 0
        %380 = vmatpush.bf16.msra.mxu0 0
        %381 = vmatpush.bf16.msra.mxu0 0
        %382 = vmatpush.bf16.msra.mxu0 0
        %383 = vmatpush.bf16.msra.mxu0 0
        %384 = vmatpush.bf16.msra.mxu0 0
        %385 = vmatpush.bf16.msra.mxu0 %v279
        %386 = vmatpush.bf16.msra.mxu0 %v271
        %387 = vmatmul.bf16.gmra.mxu0 %v299
        %v388 = vpop.f32.mrf.mxu0
        %v389 = vadd.f32 %v215, %v388
        %v390 = vpop.f32.mrf.mxu0
        %391 = vdwg.mxu0
        %392 = vmatpush.bf16.msra.mxu0 0
        %393 = vmatpush.bf16.msra.mxu0 0
        %394 = vmatpush.bf16.msra.mxu0 0
        %395 = vmatpush.bf16.msra.mxu0 0
        %396 = vmatpush.bf16.msra.mxu0 0
        %397 = vmatpush.bf16.msra.mxu0 0
        %398 = vmatpush.bf16.msra.mxu0 %v280
        %399 = vmatpush.bf16.msra.mxu0 %v272
        %400 = vmatmul.bf16.gmra.mxu0 %v299
        %v401 = vpop.f32.mrf.mxu0
        %v402 = vadd.f32 %v215, %v401
        %v403 = vpop.f32.mrf.mxu0
        %404 = vdwg.mxu0
        %v405 = vrot.slane %v311, 4
        %v406 = vmax.f32 %v311, %v405
        %v407 = vrot.slane %v406, 2
        %v408 = vmax.f32 %v406, %v407
        %v409 = vrot.slane %v408, 1
        %v410 = vmax.f32 %v408, %v409
        %v411 = vrot.slane %v324, 4
        %v412 = vmax.f32 %v324, %v411
        %v413 = vrot.slane %v412, 2
        %v414 = vmax.f32 %v412, %v413
        %v415 = vrot.slane %v414, 1
        %v416 = vmax.f32 %v414, %v415
        %v417 = vrot.slane %v337, 4
        %v418 = vmax.f32 %v337, %v417
        %v419 = vrot.slane %v418, 2
        %v420 = vmax.f32 %v418, %v419
        %v421 = vrot.slane %v420, 1
        %v422 = vmax.f32 %v420, %v421
        %v423 = vrot.slane %v350, 4
        %v424 = vmax.f32 %v350, %v423
        %v425 = vrot.slane %v424, 2
        %v426 = vmax.f32 %v424, %v425
        %v427 = vrot.slane %v426, 1
        %v428 = vmax.f32 %v426, %v427
        %v429 = vrot.slane %v363, 4
        %v430 = vmax.f32 %v363, %v429
        %v431 = vrot.slane %v430, 2
        %v432 = vmax.f32 %v430, %v431
        %v433 = vrot.slane %v432, 1
        %v434 = vmax.f32 %v432, %v433
        %v435 = vrot.slane %v376, 4
        %v436 = vmax.f32 %v376, %v435
        %v437 = vrot.slane %v436, 2
        %v438 = vmax.f32 %v436, %v437
        %v439 = vrot.slane %v438, 1
        %v440 = vmax.f32 %v438, %v439
        %v441 = vrot.slane %v389, 4
        %v442 = vmax.f32 %v389, %v441
        %v443 = vrot.slane %v442, 2
        %v444 = vmax.f32 %v442, %v443
        %v445 = vrot.slane %v444, 1
        %v446 = vmax.f32 %v444, %v445
        %v447 = vrot.slane %v402, 4
        %v448 = vmax.f32 %v402, %v447
        %v449 = vrot.slane %v448, 2
        %v450 = vmax.f32 %v448, %v449
        %v451 = vrot.slane %v450, 1
        %v452 = vmax.f32 %v450, %v451
        %v453 = vsub.f32 %v311, %v410
        %v454 = vsub.f32 %v324, %v416
        %v455 = vsub.f32 %v337, %v422
        %v456 = vsub.f32 %v350, %v428
        %v457 = vsub.f32 %v363, %v434
        %v458 = vsub.f32 %v376, %v440
        %v459 = vsub.f32 %v389, %v446
        %v460 = vsub.f32 %v402, %v452
        %v461 = vmul.f32 %v453, 1.442695
        %v462 = vpow.pop %v461
        %v463 = vmul.f32 %v454, 1.442695
        %v464 = vpow.pop %v463
        %v465 = vmul.f32 %v455, 1.442695
        %v466 = vpow.pop %v465
        %v467 = vmul.f32 %v456, 1.442695
        %v468 = vpow.pop %v467
        %v469 = vmul.f32 %v457, 1.442695
        %v470 = vpow.pop %v469
        %v471 = vmul.f32 %v458, 1.442695
        %v472 = vpow.pop %v471
        %v473 = vmul.f32 %v459, 1.442695
        %v474 = vpow.pop %v473
        %v475 = vmul.f32 %v460, 1.442695
        %v476 = vpow.pop %v475
        %v477 = vrot.slane %v462, 4
        %v478 = vadd.f32 %v462, %v477
        %v479 = vrot.slane %v478, 2
        %v480 = vadd.f32 %v478, %v479
        %v481 = vrot.slane %v480, 1
        %v482 = vadd.f32 %v480, %v481
        %v483 = vrot.slane %v464, 4
        %v484 = vadd.f32 %v464, %v483
        %v485 = vrot.slane %v484, 2
        %v486 = vadd.f32 %v484, %v485
        %v487 = vrot.slane %v486, 1
        %v488 = vadd.f32 %v486, %v487
        %v489 = vrot.slane %v466, 4
        %v490 = vadd.f32 %v466, %v489
        %v491 = vrot.slane %v490, 2
        %v492 = vadd.f32 %v490, %v491
        %v493 = vrot.slane %v492, 1
        %v494 = vadd.f32 %v492, %v493
        %v495 = vrot.slane %v468, 4
        %v496 = vadd.f32 %v468, %v495
        %v497 = vrot.slane %v496, 2
        %v498 = vadd.f32 %v496, %v497
        %v499 = vrot.slane %v498, 1
        %v500 = vadd.f32 %v498, %v499
        %v501 = vrot.slane %v470, 4
        %v502 = vadd.f32 %v470, %v501
        %v503 = vrot.slane %v502, 2
        %v504 = vadd.f32 %v502, %v503
        %v505 = vrot.slane %v504, 1
        %v506 = vadd.f32 %v504, %v505
        %v507 = vrot.slane %v472, 4
        %v508 = vadd.f32 %v472, %v507
        %v509 = vrot.slane %v508, 2
        %v510 = vadd.f32 %v508, %v509
        %v511 = vrot.slane %v510, 1
        %v512 = vadd.f32 %v510, %v511
        %v513 = vrot.slane %v474, 4
        %v514 = vadd.f32 %v474, %v513
        %v515 = vrot.slane %v514, 2
        %v516 = vadd.f32 %v514, %v515
        %v517 = vrot.slane %v516, 1
        %v518 = vadd.f32 %v516, %v517
        %v519 = vrot.slane %v476, 4
        %v520 = vadd.f32 %v476, %v519
        %v521 = vrot.slane %v520, 2
        %v522 = vadd.f32 %v520, %v521
        %v523 = vrot.slane %v522, 1
        %v524 = vadd.f32 %v522, %v523
        %v525 = vlog2.pop %v482
        %v526 = vmul.f32 %v525, 0.6931472
        %v527 = vlog2.pop %v488
        %v528 = vmul.f32 %v527, 0.6931472
        %v529 = vlog2.pop %v494
        %v530 = vmul.f32 %v529, 0.6931472
        %v531 = vlog2.pop %v500
        %v532 = vmul.f32 %v531, 0.6931472
        %v533 = vlog2.pop %v506
        %v534 = vmul.f32 %v533, 0.6931472
        %v535 = vlog2.pop %v512
        %v536 = vmul.f32 %v535, 0.6931472
        %v537 = vlog2.pop %v518
        %v538 = vmul.f32 %v537, 0.6931472
        %v539 = vlog2.pop %v524
        %v540 = vmul.f32 %v539, 0.6931472
        %v541 = vsub.f32 %v453, %v526
        %v542 = vsub.f32 %v454, %v528
        %v543 = vsub.f32 %v455, %v530
        %v544 = vsub.f32 %v456, %v532
        %v545 = vsub.f32 %v457, %v534
        %v546 = vsub.f32 %v458, %v536
        %v547 = vsub.f32 %v459, %v538
        %v548 = vsub.f32 %v460, %v540
        %549 = vst [vmem:[%s190] sm:$0xff] %v541
        %550 = vst [vmem:[%s190 + $0x8] sm:$0xff] %v542
        %551 = vst [vmem:[%s190 + $0x10] sm:$0xff] %v543
        %552 = vst [vmem:[%s190 + $0x18] sm:$0xff] %v544
        %553 = vst [vmem:[%s190 + $0x20] sm:$0xff] %v545
        %554 = vst [vmem:[%s190 + $0x28] sm:$0xff] %v546
        %555 = vst [vmem:[%s190 + $0x30] sm:$0xff] %v547
        %556 = vst [vmem:[%s190 + $0x38] sm:$0xff] %v548
        %s557 = sand.u32 %s96, 1
        %s558 = scalar_lea.sflag [#allocation4], %s557
        %s559 = sand.u32 %s96, 1
        %s560 = smul.addr %s559, 64
        %s561 = scalar_lea.vmem [#allocation5], %s560
        // Predicated region
        $region37: #{tpu_custom_call.1} parent=31 // pred_check
          %p562 = pneg %p106
        $region38: #{tpu_custom_call.1} parent=31 // pred_check_branch
          %564 = sbr.rel (%p562) target = $region40
        $region39: #{tpu_custom_call.1} parent=31 // pred_region
          %s565 = smul.u32 8, %s20
          %567 = vsyncadd %s558, 0
          %s568 = smul.addr %s565, 8
          %s569 = scalar_lea.hbm %s3, %s568
          %s571 = sshll.u32 %s561, 4
          %s572 = int_to_ptr.vmem [resolvable:$true] %s571
          %s573 = sshll.u32 %s569, 4
          %s574 = int_to_ptr.hbm [resolvable:$true] %s573
          %576 = dma.vmem_to_hbm [thread:$0]  %s572, 1024, %s574, %s558
        $region40: #{tpu_custom_call.1} parent=31 // pred_fallthru
          _
      $region32: #{tpu_custom_call.1} parent=5 // pred_fallthru
        _
      %p577 = scmp.le.s32.totalorder 2, %s15
      // Predicated region
      $region41: #{tpu_custom_call.1} parent=5 // pred_check
        %p578 = pneg %p577
      $region42: #{tpu_custom_call.1} parent=5 // pred_check_branch
        %580 = sbr.rel (%p578) target = $region44
      $region43: #{tpu_custom_call.1} parent=5 // pred_region
        %s581 = ssub.s32 %s15, 2
        // Predicated region
        $region45: #{tpu_custom_call.1} parent=43 // pred_check
          %p582 = pneg %p112
        $region46: #{tpu_custom_call.1} parent=43 // pred_check_branch
          %584 = sbr.rel (%p582) target = $region48
        $region47: #{tpu_custom_call.1} parent=43 // pred_region
          %s585 = sand.u32 %s97, 1
          %s586 = scalar_lea.sflag [#allocation4], %s585
          %s587 = sand.u32 %s97, 1
          %s588 = smul.addr %s587, 64
          %s589 = scalar_lea.vmem [#allocation5], %s588
          %591 = dma.done %s586, 1024
        $region48: #{tpu_custom_call.1} parent=43 // pred_fallthru
          _
      $region44: #{tpu_custom_call.1} parent=5 // pred_fallthru
        _
    $region6: #{tpu_custom_call.1} parent=1 // loop_footer
      %s19 = sadd.s32 1, %s15
    $region7: #{tpu_custom_call.1} parent=1 // loop_footer_branch
      %14 = sbr.rel target = $region3
    $region8: #{tpu_custom_call.1} parent=1 // loop_exit
      _
    %592 = vsyncpa [#allocation3], 1
    %s593 = scalar_lea.sflag [#allocation3], 1
    %594 = vsyncpa %s593, 1
    %595 = vsyncpa [#allocation4], 1
    %s596 = scalar_lea.sflag [#allocation4], 1
    %597 = vsyncpa %s596, 1

</llo_original>
